<compile_context>
chip_gen: v5e
topology: v5e:2x2
jax: 0.10.0
libtpu: 0.0.40
codegen_flags: <defaults>
</compile_context>

<pallas_src>
import jax
import jax.numpy as jnp
from jax import lax
from jax.experimental import pallas as pl
from jax.experimental.pallas import tpu as pltpu


def _round_up(x: int, m: int) -> int:
    return (x + m - 1) // m * m


def _lm_head_kernel(x_ref, w_ref, o_ref, acc_ref):
    # x_ref:   (tm, tk)  token tile                     (K-slab of x)
    # w_ref:   (tn, tk)  rows of weight in native [vocab, d_model] layout (K-slab)
    # o_ref:   (tm, tn)  logits tile
    # acc_ref: (tm, tn)  f32 accumulator, resident across the K grid axis
    @pl.when(pl.program_id(2) == 0)
    def _():
        acc_ref[...] = jnp.zeros_like(acc_ref)

    # Contract the shared last dim of both operands (x @ W^T) on the MXU, f32 acc.
    acc_ref[...] += lax.dot_general(
        x_ref[...],
        w_ref[...],
        dimension_numbers=(((1,), (1,)), ((), ())),
        preferred_element_type=jnp.float32,
    )

    @pl.when(pl.program_id(2) == pl.num_programs(2) - 1)
    def _():
        o_ref[...] = acc_ref[...].astype(o_ref.dtype)


def lm_head(
    x: jax.Array,
    weight: jax.Array,
    *,
    tm: int = 512,
    tn: int = 512,
    tk: int = 512,
    compute_dtype=None,
    out_dtype=None,
) -> jax.Array:
    """Pallas equivalent of torch.nn.Linear(d_model, vocab, bias=False).

    x:      [batch, seq, d_model]
    weight: [vocab, d_model]   (PyTorch nn.Linear weight layout, used as-is)
    returns [batch, seq, vocab]
    """
    b, s, d_model = x.shape
    vocab, d_model_w = weight.shape
    assert d_model == d_model_w, "x feature dim must match weight's d_model"

    if out_dtype is None:
        out_dtype = x.dtype  # match nn.Linear: output dtype follows the input

    if compute_dtype is not None:
        x = x.astype(compute_dtype)
        weight = weight.astype(compute_dtype)

    m = b * s
    x2d = x.reshape(m, d_model)

    # --- tile sizes ----------------------------------------------------------
    # Sublane (second-minor) dims multiple of 8, lane (minor) dims multiple of 128.
    tm = _round_up(max(tm, 8), 8)
    tn = _round_up(max(tn, 128), 128)
    tk = _round_up(max(tk, 128), 128)

    tm_eff = min(tm, _round_up(m, 8))
    tn_eff = min(tn, _round_up(vocab, 128))
    if d_model <= tk:
        # Single full-K block (block dim == full array dim is allowed, no padding).
        tk_eff = d_model
        d_pad = d_model
    else:
        tk_eff = tk
        d_pad = _round_up(d_model, tk_eff)

    m_pad = _round_up(m, tm_eff)
    v_pad = _round_up(vocab, tn_eff)

    # --- zero-padding (zeros contribute nothing to the contraction) ----------
    if (m_pad != m) or (d_pad != d_model):
        x2d = jnp.pad(x2d, ((0, m_pad - m), (0, d_pad - d_model)))
    w_p = weight
    if (v_pad != vocab) or (d_pad != d_model):
        w_p = jnp.pad(weight, ((0, v_pad - vocab), (0, d_pad - d_model)))

    grid = (m_pad // tm_eff, v_pad // tn_eff, d_pad // tk_eff)  # K innermost

    # --- explicit VMEM budget: double-buffered tiles + f32 accumulator -------
    bx = jnp.dtype(x2d.dtype).itemsize
    bw = jnp.dtype(w_p.dtype).itemsize
    bo = jnp.dtype(out_dtype).itemsize
    vmem_needed = (
        2 * (tm_eff * tk_eff * bx + tn_eff * tk_eff * bw + tm_eff * tn_eff * bo)
        + tm_eff * tn_eff * 4  # accumulator
    )
    vmem_limit = int(min(vmem_needed + (8 << 20), 56 << 20))  # fits v7x's 64 MiB

    cost = pl.CostEstimate(
        flops=2 * m_pad * d_pad * v_pad,
        transcendentals=0,
        bytes_accessed=(
            grid[1] * m_pad * d_pad * bx   # x streamed once per vocab slab
            + grid[0] * v_pad * d_pad * bw  # weight streamed once per M slab
            + m_pad * v_pad * bo            # logits written once
        ),
    )

    out2d = pl.pallas_call(
        _lm_head_kernel,
        out_shape=jax.ShapeDtypeStruct((m_pad, v_pad), out_dtype),
        grid=grid,
        in_specs=[
            pl.BlockSpec((tm_eff, tk_eff), lambda i, j, k: (i, k)),  # token K-slab
            pl.BlockSpec((tn_eff, tk_eff), lambda i, j, k: (j, k)),  # weight rows, native layout
        ],
        out_specs=pl.BlockSpec((tm_eff, tn_eff), lambda i, j, k: (i, j)),
        scratch_shapes=[pltpu.VMEM((tm_eff, tn_eff), jnp.float32)],
        compiler_params=pltpu.CompilerParams(
            dimension_semantics=("parallel", "parallel", "arbitrary"),
            vmem_limit_bytes=vmem_limit,
        ),
        cost_estimate=cost,
    )(x2d, w_p)

    return out2d[:m, :vocab].reshape(b, s, vocab)


if __name__ == "__main__":
    # Small config consistent with the module: cfg.model.d_model, cfg.data.vocab_size
    batch, seq, d_model, vocab = 2, 8, 32, 256

    key = jax.random.PRNGKey(0)
    kx, kw = jax.random.split(key)
    x = jax.random.normal(kx, (batch, seq, d_model), dtype=jnp.float32)
    # Deterministic synthetic weight, same shape as nn.Linear(d_model, vocab).weight
    weight = jax.random.normal(kw, (vocab, d_model), dtype=jnp.float32) * (d_model ** -0.5)

    ref = jnp.einsum("bsd,vd->bsv", x, weight)

    # 1) default (f32) path
    out = jax.block_until_ready(lm_head(x, weight))
    assert out.shape == (batch, seq, vocab)
    assert jnp.allclose(out, ref, atol=1e-4, rtol=1e-4)

    # 2) bf16-operand / f32-accumulation path (recommended for real LM-head shapes)
    out_bf16 = jax.block_until_ready(lm_head(x, weight, compute_dtype=jnp.bfloat16))
    assert out_bf16.shape == (batch, seq, vocab)
    assert jnp.allclose(out_bf16, ref, atol=1e-1, rtol=1e-1)

    # 3) non-aligned shapes exercise the M / vocab padding path
    x_odd = jax.random.normal(kx, (batch, 5, d_model), dtype=jnp.float32)
    w_odd = jax.random.normal(kw, (200, d_model), dtype=jnp.float32) * (d_model ** -0.5)
    out_odd = jax.block_until_ready(lm_head(x_odd, w_odd))
    ref_odd = jnp.einsum("bsd,vd->bsv", x_odd, w_odd)
    assert out_odd.shape == (batch, 5, 200)
    assert jnp.allclose(out_odd, ref_odd, atol=1e-4, rtol=1e-4)

    # 4) large-d_model path exercises the K grid axis + accumulator (tk < d_model)
    d_big = 640
    x_big = jax.random.normal(kx, (batch, seq, d_big), dtype=jnp.float32)
    w_big = jax.random.normal(kw, (vocab, d_big), dtype=jnp.float32) * (d_big ** -0.5)
    out_big = jax.block_until_ready(lm_head(x_big, w_big, tk=256))
    ref_big = jnp.einsum("bsd,vd->bsv", x_big, w_big)
    assert jnp.allclose(out_big, ref_big, atol=1e-3, rtol=1e-3)

    print("KERNEL_OK")
</pallas_src>

<mosaic_0001>
module attributes {stable_mosaic.version = 11 : i64} {
  func.func @_lm_head_kernel(%arg0: i32, %arg1: i32, %arg2: i32, %arg3: memref<16x32xf32, #tpu.memory_space<vmem>>, %arg4: memref<256x32xf32, #tpu.memory_space<vmem>>, %arg5: memref<16x256xf32, #tpu.memory_space<vmem>>, %arg6: memref<16x256xf32, #tpu.memory_space<vmem>>) attributes {dimension_semantics = [#tpu.dimension_semantics<parallel>, #tpu.dimension_semantics<parallel>, #tpu.dimension_semantics<arbitrary>], iteration_bounds = array<i64: 1, 1, 1>, scalar_prefetch = 0 : i64, scratch_operands = 1 : i64, tpu.core_type = #tpu.core_type<tc>, window_params = [{transform_indices = @transform_0, window_bounds = array<i64: 16, 32>}, {transform_indices = @transform_1, window_bounds = array<i64: 256, 32>}, {transform_indices = @transform_2, window_bounds = array<i64: 16, 256>}]} {
    %c0_i32 = arith.constant 0 : i32
    %0 = arith.cmpi eq, %arg2, %c0_i32 : i32
    %1 = arith.extui %0 : i1 to i32
    %c0_i32_0 = arith.constant 0 : i32
    %2 = arith.cmpi ne, %1, %c0_i32_0 : i32
    scf.if %2 {
      %cst_10 = arith.constant 0.000000e+00 : f32
      %12 = vector.broadcast %cst_10 : f32 to vector<16x256xf32>
      %c0_11 = arith.constant 0 : index
      %c0_12 = arith.constant 0 : index
      %13 = vector.load %arg6[%c0_11, %c0_12] : memref<16x256xf32, #tpu.memory_space<vmem>>, vector<16x256xf32>
      tpu.vector_store %arg6[%c0_11, %c0_12], %12 {strides = array<i32>} : memref<16x256xf32, #tpu.memory_space<vmem>>, vector<16x256xf32>,
    } else {
    }
    %c0 = arith.constant 0 : index
    %c0_1 = arith.constant 0 : index
    %3 = vector.load %arg6[%c0, %c0_1] : memref<16x256xf32, #tpu.memory_space<vmem>>, vector<16x256xf32>
    %c0_2 = arith.constant 0 : index
    %c0_3 = arith.constant 0 : index
    %4 = vector.load %arg3[%c0_2, %c0_3] : memref<16x32xf32, #tpu.memory_space<vmem>>, vector<16x32xf32>
    %c0_4 = arith.constant 0 : index
    %c0_5 = arith.constant 0 : index
    %5 = vector.load %arg4[%c0_4, %c0_5] : memref<256x32xf32, #tpu.memory_space<vmem>>, vector<256x32xf32>
    %cst = arith.constant dense<0.000000e+00> : vector<16x256xf32>
    %6 = tpu.matmul %4, %5, %cst {dimension_numbers = #tpu.dot_dimension_numbers<[1], [1], [0], [0], [0, 0, 1, 0], [], []>} : vector<16x32xf32>, vector<256x32xf32>, vector<16x256xf32> -> vector<16x256xf32>
    %7 = arith.addf %3, %6 : vector<16x256xf32>
    %c0_6 = arith.constant 0 : index
    %c0_7 = arith.constant 0 : index
    %8 = vector.load %arg6[%c0_6, %c0_7] : memref<16x256xf32, #tpu.memory_space<vmem>>, vector<16x256xf32>
    tpu.vector_store %arg6[%c0_6, %c0_7], %7 {strides = array<i32>} : memref<16x256xf32, #tpu.memory_space<vmem>>, vector<16x256xf32>,
    %c0_i32_8 = arith.constant 0 : i32
    %9 = arith.cmpi eq, %arg2, %c0_i32_8 : i32
    %10 = arith.extui %9 : i1 to i32
    %c0_i32_9 = arith.constant 0 : i32
    %11 = arith.cmpi ne, %10, %c0_i32_9 : i32
    scf.if %11 {
      %c0_10 = arith.constant 0 : index
      %c0_11 = arith.constant 0 : index
      %12 = vector.load %arg6[%c0_10, %c0_11] : memref<16x256xf32, #tpu.memory_space<vmem>>, vector<16x256xf32>
      %c0_12 = arith.constant 0 : index
      %c0_13 = arith.constant 0 : index
      %13 = vector.load %arg5[%c0_12, %c0_13] : memref<16x256xf32, #tpu.memory_space<vmem>>, vector<16x256xf32>
      tpu.vector_store %arg5[%c0_12, %c0_13], %12 {strides = array<i32>} : memref<16x256xf32, #tpu.memory_space<vmem>>, vector<16x256xf32>,
    } else {
    }
    return
  }
  func.func @transform_0(%arg0: i32, %arg1: i32, %arg2: i32) -> (i32, i32) {
    %c0_i32 = arith.constant 0 : i32
    return %arg0, %arg2 : i32, i32
  }
  func.func @transform_1(%arg0: i32, %arg1: i32, %arg2: i32) -> (i32, i32) {
    %c0_i32 = arith.constant 0 : i32
    return %arg1, %arg2 : i32, i32
  }
  func.func @transform_2(%arg0: i32, %arg1: i32, %arg2: i32) -> (i32, i32) {
    %c0_i32 = arith.constant 0 : i32
    return %arg0, %arg1 : i32, i32
  }
}

</mosaic_0001>

<llo_original>
// kernel: tpu_custom_call.1
$region0: #{tpu_custom_call.1}
  #allocation0 [shape = 'u32[]', space=smem, size = 0x4, offset = 0x4, fixed_abs, tag = 'smem constant byte address 0x4 - core index']
  #allocation1 [shape = 'u32[72,128]{1,0:T(1,128)}', space=vmem, size = 0x9000, scoped, tag = 'internal scratch']
  #allocation2 [shape = 'f32[16,256]{1,0:T(8,128)}', space=vmem, size = 0x4000, scoped, tag = 'scratch operand']
  %s0 = inlined_call_operand.vmem [shape: f32[16,32], index: 0, kind: input, shape index: {}]
  %s1 = inlined_call_operand.vmem [shape: f32[256,32], index: 1, kind: input, shape index: {}]
  %s2 = inlined_call_operand.hbm [shape: f32[16,256], index: 2, kind: output, shape index: {}]
  %s3 = sld [smem:[#allocation0]]
  $region26: #{tpu_custom_call.1} parent=0
    _
  %s5 = ssub.s32 1, %s3
  %s6 = scalar_select 0, %s5, %s3
  $region1: #{tpu_custom_call.1} parent=0
    #allocation3 [shape = 'u8[16384]{0}', space=vmem, size = 0x4000, scoped, tag = 'output window, operand 0, single buffered']
    #allocation4 [shape = 's32[1]{0}', space=sflag, size = 0x4, scoped, tag = 'scoped memory for tpu_custom_call.1']
    %7 = vsyncpa [#allocation4], 0
    // Predicated region
    $region2: #{tpu_custom_call.1} parent=1 // pred_check
      _
    $region3: #{tpu_custom_call.1} parent=1 // pred_check_branch
      %9 = sbr.rel (0) target = $region5
    $region4: #{tpu_custom_call.1} parent=1 // pred_region
      _
    $region5: #{tpu_custom_call.1} parent=1 // pred_fallthru
      _
    // Predicated region
    $region6: #{tpu_custom_call.1} parent=1 // pred_check
      _
    $region7: #{tpu_custom_call.1} parent=1 // pred_check_branch
      %11 = sbr.rel (0) target = $region9
    $region8: #{tpu_custom_call.1} parent=1 // pred_region
      _
    $region9: #{tpu_custom_call.1} parent=1 // pred_fallthru
      _
    %p12 = scmp.eq.s32.totalorder 0, 0
    // Predicated region
    $region10: #{tpu_custom_call.1} parent=1 // pred_check
      %p13 = pneg %p12
    $region11: #{tpu_custom_call.1} parent=1 // pred_check_branch
      %15 = sbr.rel (%p13) target = $region13
    $region12: #{tpu_custom_call.1} parent=1 // pred_region
      %16 = vst [vmem:[#allocation2] sm:$0xff] 0.0
      %17 = vst [vmem:[#allocation2 + $0x8] sm:$0xff] 0.0
      %18 = vst [vmem:[#allocation2 + $0x10] sm:$0xff] 0.0
      %19 = vst [vmem:[#allocation2 + $0x18] sm:$0xff] 0.0
    $region13: #{tpu_custom_call.1} parent=1 // pred_fallthru
      _
    %v20 = vld [vmem:[#allocation2] sm:$0xff]
    %v21 = vld [vmem:[#allocation2 + $0x8] sm:$0xff]
    %v22 = vld [vmem:[#allocation2 + $0x10] sm:$0xff]
    %v23 = vld [vmem:[#allocation2 + $0x18] sm:$0xff]
    %v24 = vld [vmem:[%s0] sm:$0xff]
    %v25 = vld [vmem:[%s0 + $0x8] sm:$0xff]
    %v26 = vld [vmem:[%s1] sm:$0xff]
    %v27 = vld [vmem:[%s1 + $0x8] sm:$0xff]
    %v28 = vld [vmem:[%s1 + $0x10] sm:$0xff]
    %v29 = vld [vmem:[%s1 + $0x18] sm:$0xff]
    %v30 = vld [vmem:[%s1 + $0x20] sm:$0xff]
    %v31 = vld [vmem:[%s1 + $0x28] sm:$0xff]
    %v32 = vld [vmem:[%s1 + $0x30] sm:$0xff]
    %v33 = vld [vmem:[%s1 + $0x38] sm:$0xff]
    %v34 = vld [vmem:[%s1 + $0x40] sm:$0xff]
    %v35 = vld [vmem:[%s1 + $0x48] sm:$0xff]
    %v36 = vld [vmem:[%s1 + $0x50] sm:$0xff]
    %v37 = vld [vmem:[%s1 + $0x58] sm:$0xff]
    %v38 = vld [vmem:[%s1 + $0x60] sm:$0xff]
    %v39 = vld [vmem:[%s1 + $0x68] sm:$0xff]
    %v40 = vld [vmem:[%s1 + $0x70] sm:$0xff]
    %v41 = vld [vmem:[%s1 + $0x78] sm:$0xff]
    %v42 = vld [vmem:[%s1 + $0x80] sm:$0xff]
    %v43 = vld [vmem:[%s1 + $0x88] sm:$0xff]
    %v44 = vld [vmem:[%s1 + $0x90] sm:$0xff]
    %v45 = vld [vmem:[%s1 + $0x98] sm:$0xff]
    %v46 = vld [vmem:[%s1 + $0xa0] sm:$0xff]
    %v47 = vld [vmem:[%s1 + $0xa8] sm:$0xff]
    %v48 = vld [vmem:[%s1 + $0xb0] sm:$0xff]
    %v49 = vld [vmem:[%s1 + $0xb8] sm:$0xff]
    %v50 = vld [vmem:[%s1 + $0xc0] sm:$0xff]
    %v51 = vld [vmem:[%s1 + $0xc8] sm:$0xff]
    %v52 = vld [vmem:[%s1 + $0xd0] sm:$0xff]
    %v53 = vld [vmem:[%s1 + $0xd8] sm:$0xff]
    %v54 = vld [vmem:[%s1 + $0xe0] sm:$0xff]
    %v55 = vld [vmem:[%s1 + $0xe8] sm:$0xff]
    %v56 = vld [vmem:[%s1 + $0xf0] sm:$0xff]
    %v57 = vld [vmem:[%s1 + $0xf8] sm:$0xff]
    %vm58 = vcmask 261120
    %v60 = vsel %vm58, %v24, 0
    %v63 = vsel %vm58, %v25, 0
    %v66 = vsel %vm58, %v26, 0
    %v69 = vsel %vm58, %v27, 0
    %v72 = vsel %vm58, %v28, 0
    %v75 = vsel %vm58, %v29, 0
    %v78 = vsel %vm58, %v30, 0
    %v81 = vsel %vm58, %v31, 0
    %v84 = vsel %vm58, %v32, 0
    %v87 = vsel %vm58, %v33, 0
    %v90 = vsel %vm58, %v34, 0
    %v93 = vsel %vm58, %v35, 0
    %v96 = vsel %vm58, %v36, 0
    %v99 = vsel %vm58, %v37, 0
    %v102 = vsel %vm58, %v38, 0
    %v105 = vsel %vm58, %v39, 0
    %v108 = vsel %vm58, %v40, 0
    %v111 = vsel %vm58, %v41, 0
    %v114 = vsel %vm58, %v42, 0
    %v117 = vsel %vm58, %v43, 0
    %v120 = vsel %vm58, %v44, 0
    %v123 = vsel %vm58, %v45, 0
    %v126 = vsel %vm58, %v46, 0
    %v129 = vsel %vm58, %v47, 0
    %v132 = vsel %vm58, %v48, 0
    %v135 = vsel %vm58, %v49, 0
    %v138 = vsel %vm58, %v50, 0
    %v141 = vsel %vm58, %v51, 0
    %v144 = vsel %vm58, %v52, 0
    %v147 = vsel %vm58, %v53, 0
    %v150 = vsel %vm58, %v54, 0
    %v153 = vsel %vm58, %v55, 0
    %v156 = vsel %vm58, %v56, 0
    %v159 = vsel %vm58, %v57, 0
    %161 = vmatpush.xpose.msra.mxu0 %v111
    %162 = vmatpush.xpose.msra.mxu0 %v108
    %163 = vmatpush.xpose.msra.mxu0 %v105
    %164 = vmatpush.xpose.msra.mxu0 %v102
    %165 = vmatpush.xpose.msra.mxu0 %v99
    %166 = vmatpush.xpose.msra.mxu0 %v96
    %167 = vmatpush.xpose.msra.mxu0 %v93
    %168 = vmatpush.xpose.msra.mxu0 %v90
    %169 = vmatpush.xpose.msra.mxu0 %v87
    %170 = vmatpush.xpose.msra.mxu0 %v84
    %171 = vmatpush.xpose.msra.mxu0 %v81
    %172 = vmatpush.xpose.msra.mxu0 %v78
    %173 = vmatpush.xpose.msra.mxu0 %v75
    %174 = vmatpush.xpose.msra.mxu0 %v72
    %175 = vmatpush.xpose.msra.mxu0 %v69
    %176 = vmatpush.xpose.msra.mxu0 %v66
    %177 = vmatmul.f32.gmra.mxu0 %v60
    %v178 = vpop.f32.mrf.mxu0
    %v179 = vadd.f32 0.0, %v178
    %180 = vmatmul.f32.gmra.mxu0 %v63
    %v181 = vpop.f32.mrf.mxu0
    %v182 = vadd.f32 0.0, %v181
    %183 = vdwg.mxu0
    %184 = vmatpush.xpose.msra.mxu0 %v159
    %185 = vmatpush.xpose.msra.mxu0 %v156
    %186 = vmatpush.xpose.msra.mxu0 %v153
    %187 = vmatpush.xpose.msra.mxu0 %v150
    %188 = vmatpush.xpose.msra.mxu0 %v147
    %189 = vmatpush.xpose.msra.mxu0 %v144
    %190 = vmatpush.xpose.msra.mxu0 %v141
    %191 = vmatpush.xpose.msra.mxu0 %v138
    %192 = vmatpush.xpose.msra.mxu0 %v135
    %193 = vmatpush.xpose.msra.mxu0 %v132
    %194 = vmatpush.xpose.msra.mxu0 %v129
    %195 = vmatpush.xpose.msra.mxu0 %v126
    %196 = vmatpush.xpose.msra.mxu0 %v123
    %197 = vmatpush.xpose.msra.mxu0 %v120
    %198 = vmatpush.xpose.msra.mxu0 %v117
    %199 = vmatpush.xpose.msra.mxu0 %v114
    %200 = vmatmul.f32.gmra.mxu0 %v60
    %v201 = vpop.f32.mrf.mxu0
    %v202 = vadd.f32 0.0, %v201
    %203 = vmatmul.f32.gmra.mxu0 %v63
    %v204 = vpop.f32.mrf.mxu0
    %v205 = vadd.f32 0.0, %v204
    %206 = vdwg.mxu0
    %v207 = vadd.f32 %v20, %v179
    %v208 = vadd.f32 %v21, %v202
    %v209 = vadd.f32 %v22, %v182
    %v210 = vadd.f32 %v23, %v205
    %211 = vst [vmem:[#allocation2] sm:$0xff] %v207
    %212 = vst [vmem:[#allocation2 + $0x8] sm:$0xff] %v208
    %213 = vst [vmem:[#allocation2 + $0x10] sm:$0xff] %v209
    %214 = vst [vmem:[#allocation2 + $0x18] sm:$0xff] %v210
    // Predicated region
    $region14: #{tpu_custom_call.1} parent=1 // pred_check
      %p215 = pneg %p12
    $region15: #{tpu_custom_call.1} parent=1 // pred_check_branch
      %217 = sbr.rel (%p215) target = $region17
    $region16: #{tpu_custom_call.1} parent=1 // pred_region
      %v218 = vld [vmem:[#allocation2] sm:$0xff]
      %v219 = vld [vmem:[#allocation2 + $0x8] sm:$0xff]
      %v220 = vld [vmem:[#allocation2 + $0x10] sm:$0xff]
      %v221 = vld [vmem:[#allocation2 + $0x18] sm:$0xff]
      %222 = vst [vmem:[#allocation3] sm:$0xff] %v218
      %223 = vst [vmem:[#allocation3 + $0x8] sm:$0xff] %v219
      %224 = vst [vmem:[#allocation3 + $0x10] sm:$0xff] %v220
      %225 = vst [vmem:[#allocation3 + $0x18] sm:$0xff] %v221
    $region17: #{tpu_custom_call.1} parent=1 // pred_fallthru
      _
    // Predicated region
    $region18: #{tpu_custom_call.1} parent=1 // pred_check
      _
    $region19: #{tpu_custom_call.1} parent=1 // pred_check_branch
      %227 = sbr.rel (0) target = $region21
    $region20: #{tpu_custom_call.1} parent=1 // pred_region
      %229 = vsyncadd [#allocation4], 0
      %s230 = sshll.u32 [#allocation3], 4
      %s231 = int_to_ptr.vmem [resolvable:$true] %s230
      %s232 = sshll.u32 %s2, 4
      %s233 = int_to_ptr.hbm [resolvable:$true] %s232
      %238 = dma.vmem_to_hbm [thread:$0]  %s231, 512, %s233, [#allocation4], 256, 256, 16
    $region21: #{tpu_custom_call.1} parent=1 // pred_fallthru
      _
    // Predicated region
    $region22: #{tpu_custom_call.1} parent=1 // pred_check
      _
    $region23: #{tpu_custom_call.1} parent=1 // pred_check_branch
      %240 = sbr.rel (0) target = $region25
    $region24: #{tpu_custom_call.1} parent=1 // pred_region
      %242 = dma.done [#allocation4], 512
    $region25: #{tpu_custom_call.1} parent=1 // pred_fallthru
      _
    %243 = vsyncpa [#allocation4], 1

</llo_original>
